<compile_context>
chip_gen: v5e
topology: v5e:2x2
jax: 0.10.0
libtpu: 0.0.40
codegen_flags: <defaults>
</compile_context>

<pallas_src>
import functools
import math

import numpy as np
import jax
import jax.numpy as jnp
from jax import lax
from jax.experimental import pallas as pl
from jax.experimental.pallas import tpu as pltpu

ROLLOFF = 0.99
LPF_WIDTH = 6


# ----------------------------------------------------------------------------
# Sinc resample operators (formulas from audio_diffusion_pytorch.resample),
# built once in numpy; applied as a (block-banded) matmul in Pallas.
# ----------------------------------------------------------------------------
def _resample_taps(factor_in, factor_out):
    base = min(factor_in, factor_out) * ROLLOFF
    width = math.ceil(LPF_WIDTH * factor_in / base)
    idx = np.arange(-width, width + factor_in, dtype=np.float64) / factor_in
    t = np.arange(0, -factor_out, -1, dtype=np.float64)[:, None] / factor_out + idx[None, :]
    t = np.clip(t * base, -LPF_WIDTH, LPF_WIDTH) * math.pi
    window = np.cos(t / LPF_WIDTH / 2.0) ** 2
    scale = base / factor_in
    kern = np.where(t == 0.0, 1.0, np.sin(t) / np.where(t == 0.0, 1.0, t))
    return kern * window * scale, width  # (factor_out, K), width


def _downsample_matrix(T, f):
    kern, w = _resample_taps(f, 1)          # (1, K),  K = 2*w + f
    K = kern.shape[1]
    L = T // f
    D = np.zeros((L, T), dtype=np.float64)
    for j in range(L):
        for k in range(K):
            t = j * f + k - w
            if 0 <= t < T:
                D[j, t] += kern[0, k]
    return D                                 # down[j] = sum_t D[j,t] * x[t]


def _upsample_matrix(L, f):
    kern, w = _resample_taps(1, f)           # (f, 2*w+1)
    K = kern.shape[1]
    U = np.zeros((f * L, L), dtype=np.float64)
    for l in range(L):
        for p in range(f):
            m = l * f + p
            for k in range(K):
                s = l + k - w
                if 0 <= s < L:
                    U[m, s] += kern[p, k]
    return U                                 # up[m] = sum_s U[m,s] * down[s]


def _pick_tile(dim, preferred=(512, 256, 128)):
    for t in preferred:
        if dim % t == 0:
            return t
    return dim  # unreachable for lane-padded dims (always a multiple of 128)


# ----------------------------------------------------------------------------
# Kernel 1: grouped re-upsample matmul   out[m-tile] = X_sorted[m-tile] @ R[factor(m)]
# Grid (row-tiles, out-T tiles, contraction), K innermost ("arbitrary"), f32 VMEM
# accumulator, bf16 operands.  The per-row-tile factor index is scalar-prefetched and
# used in R's index_map; the contraction only visits blocks inside the sinc band when
# T is large enough for that to matter (block-banded matmul).
# ----------------------------------------------------------------------------
def _reup_kernel(bf_ref, x_ref, r_ref, o_ref, acc_ref, *, banded, ratio, n_side, num_kb):
    del bf_ref  # only consumed by the index_maps
    k = pl.program_id(2)

    @pl.when(k == 0)
    def _init():
        acc_ref[...] = jnp.zeros_like(acc_ref)

    def _accum():
        acc_ref[...] += jnp.dot(x_ref[...], r_ref[0],
                                preferred_element_type=jnp.float32)

    if banded:
        kb = pl.program_id(1) * ratio + k - n_side
        pl.when(jnp.logical_and(kb >= 0, kb < num_kb))(_accum)
    else:
        _accum()

    @pl.when(k == pl.num_programs(2) - 1)
    def _finalize():
        o_ref[...] = acc_ref[...]


def reupsample_pallas(x2d, r_all, block_factor, band_halfwidth, tm):
    M_pad, T_pad = x2d.shape
    tn = _pick_tile(T_pad)
    tk = 128 if T_pad % 128 == 0 else T_pad   # tk decoupled from tn for tight banding
    num_mb = M_pad // tm
    num_jb = T_pad // tn
    num_kb = T_pad // tk
    ratio = tn // tk
    n_side = band_halfwidth // tk + 1          # safe over-cover of the sinc band
    banded = (ratio + 2 * n_side) < num_kb
    grid_k = (ratio + 2 * n_side) if banded else num_kb

    if banded:
        def _kb(j, k):
            return jnp.clip(j * ratio + k - n_side, 0, num_kb - 1)
    else:
        def _kb(j, k):
            return k

    kernel = functools.partial(_reup_kernel, banded=banded, ratio=ratio,
                               n_side=n_side, num_kb=num_kb)

    grid_spec = pltpu.PrefetchScalarGridSpec(
        num_scalar_prefetch=1,
        grid=(num_mb, num_jb, grid_k),
        in_specs=[
            pl.BlockSpec((tm, tk), lambda m, j, k, bf: (m, _kb(j, k))),
            pl.BlockSpec((1, tk, tn), lambda m, j, k, bf: (bf[m], _kb(j, k), j)),
        ],
        out_specs=pl.BlockSpec((tm, tn), lambda m, j, k, bf: (m, j)),
        scratch_shapes=[pltpu.VMEM((tm, tn), jnp.float32)],
    )
    return pl.pallas_call(
        kernel,
        grid_spec=grid_spec,
        out_shape=jax.ShapeDtypeStruct((M_pad, T_pad), jnp.float32),
        compiler_params=pltpu.CompilerParams(
            dimension_semantics=("parallel", "parallel", "arbitrary"),
            vmem_limit_bytes=64 * 1024 * 1024,
        ),
    )(block_factor, x2d, r_all)


# ----------------------------------------------------------------------------
# Kernel 2: fused tail -- v-noising + FiLM-conditioned 3-tap conv denoiser (stand-in)
# + v-target + per-(batch,channel) squared-error partial sums.  Grid over batch
# ("parallel"); length is the lane axis (always padded to a multiple of 128).
# The conditioning channels are read from the SORTED/padded reup output via a
# scalar-prefetched slot table (no unsort gather in HBM).
# ----------------------------------------------------------------------------
def _tail_kernel(slot_ref, x_ref, nz_ref, ab_ref, film_ref, ch_ref, w_ref, b_ref,
                 sse_ref, *, t_real):
    del slot_ref  # only consumed by the channels index_map
    x = x_ref[0]        # (C, T)  f32
    nz = nz_ref[0]      # (C, T)
    ch = ch_ref[0]      # (C, T)
    C, T = x.shape

    ab = ab_ref[0]                      # (2, 1)
    alpha = ab[0:1, :]
    beta = ab[1:2, :]
    x_noisy = alpha * x + beta * nz
    x_target = alpha * nz - beta * x

    # concat noisy signal with re-upsampled context channels -> (2C, T)
    xin = jnp.concatenate([x_noisy, ch], axis=0)

    # 3-tap conv (padding=1) as three (C,2C)@(2C,T) dots + output shifts.
    y0 = jnp.dot(w_ref[0], xin, preferred_element_type=jnp.float32)   # tap at t-1
    y1 = jnp.dot(w_ref[1], xin, preferred_element_type=jnp.float32)   # tap at t
    y2 = jnp.dot(w_ref[2], xin, preferred_element_type=jnp.float32)   # tap at t+1

    col = lax.broadcasted_iota(jnp.int32, (1, T), 1)                  # (1, T) only
    left_c = jnp.where(col == 0, 0.0, pltpu.roll(y0, 1, axis=1))      # y0[:, t-1]
    right_c = jnp.where(col == T - 1, 0.0, pltpu.roll(y2, T - 1, axis=1))  # y2[:, t+1]
    conv = y1 + left_c + right_c + b_ref[...]                         # (C, T)

    film = film_ref[0]                  # (2C, 1)
    scale = film[:C, :]
    shift = film[C:, :]
    v_pred = jnp.tanh(conv) * (1.0 + scale) + shift

    d = v_pred - x_target
    if t_real != T:                     # mask lane-padding columns out of the loss
        d = jnp.where(col < t_real, d, 0.0)
    sse_ref[0] = jnp.sum(d * d, axis=1, keepdims=True)  # (C, 1) partial sums


def tail_pallas(chan_slot, x, noise, ab, film, channels_sorted, w3, bias, t_real):
    B, C, T = x.shape                    # T == lane-padded length
    C2 = 2 * C
    kernel = functools.partial(_tail_kernel, t_real=t_real)
    grid_spec = pltpu.PrefetchScalarGridSpec(
        num_scalar_prefetch=1,
        grid=(B,),
        in_specs=[
            pl.BlockSpec((1, C, T), lambda b, slot: (b, 0, 0)),        # x
            pl.BlockSpec((1, C, T), lambda b, slot: (b, 0, 0)),        # noise
            pl.BlockSpec((1, 2, 1), lambda b, slot: (b, 0, 0)),        # [cos, sin]
            pl.BlockSpec((1, C2, 1), lambda b, slot: (b, 0, 0)),       # FiLM scale/shift
            pl.BlockSpec((1, C, T), lambda b, slot: (slot[b], 0, 0)),  # channels (sorted)
            pl.BlockSpec((3, C, C2), lambda b, slot: (0, 0, 0)),       # conv taps
            pl.BlockSpec((C, 1), lambda b, slot: (0, 0)),              # conv bias
        ],
        out_specs=pl.BlockSpec((1, C, 1), lambda b, slot: (b, 0, 0)),
    )
    return pl.pallas_call(
        kernel,
        grid_spec=grid_spec,
        out_shape=jax.ShapeDtypeStruct((B, C, 1), jnp.float32),
        compiler_params=pltpu.CompilerParams(
            dimension_semantics=("parallel",),
            vmem_limit_bytes=64 * 1024 * 1024,
        ),
    )(chan_slot, x, noise, ab, film, channels_sorted, w3, bias)


# ----------------------------------------------------------------------------
# Module
# ----------------------------------------------------------------------------
class DiffusionUpsampler1dPallas:
    def __init__(self, in_channels, factor, length, factor_features=None, key=None):
        self.in_channels = in_channels
        self.factors = list(factor) if isinstance(factor, (list, tuple)) else [factor]
        self.length = length
        self.use_conditioning = factor_features is not None
        self.feat_dim = factor_features if self.use_conditioning else 16

        # Lane-pad T to a multiple of 128 so every block tiles cleanly.
        self.t_pad = length if length % 128 == 0 else ((length + 127) // 128) * 128

        # Composed sinc down+up operators R_f = D_f^T @ U_f^T (reup = x @ R_f),
        # zero-padded to (t_pad, t_pad), stored in bf16 (f32 accumulation in-kernel).
        r_list = []
        band = 0
        for f in self.factors:
            assert length % f == 0, "length must be divisible by every factor"
            D = _downsample_matrix(length, f)          # (L, T)
            U = _upsample_matrix(length // f, f)       # (T, L)
            R = D.T @ U.T                              # (T, T)
            rr, cc = np.nonzero(R != 0.0)
            if rr.size:
                band = max(band, int(np.max(np.abs(rr - cc))))
            Rp = np.zeros((self.t_pad, self.t_pad), np.float64)
            Rp[:length, :length] = R
            r_list.append(Rp)
        self.r_all = jnp.asarray(np.stack(r_list), jnp.bfloat16)   # (NF, Tp, Tp)
        self.band_halfwidth = band

        # Grouped-matmul geometry: nb batches per LHS row tile so tm = nb*C is a
        # multiple of 8 and ~>=128 (tall MXU tiles).
        g = 8 // math.gcd(in_channels, 8)
        self.nb = g * max(1, math.ceil(128 / (g * in_channels)))
        self.tm = self.nb * in_channels

        # SinusoidalEmbedding scales (tiny, plain JAX).
        half = self.feat_dim // 2
        self.sin_scales = jnp.exp(
            jnp.arange(half, dtype=jnp.float32) * (-math.log(1e4) / max(half - 1, 1))
        ).reshape(1, half)

        # Deterministic stand-in denoiser parameters (see TODO at top of file).
        k1, k2 = jax.random.split(key)
        c2 = 2 * in_channels
        w_conv = 0.1 * jax.random.normal(k1, (3, c2, in_channels), jnp.float32)
        self.w3 = jnp.transpose(w_conv, (0, 2, 1))     # (3, C, 2C): per-tap weights
        self.bc = jnp.zeros((in_channels, 1), jnp.float32)
        self.w_film = 0.1 * jax.random.normal(k2, (self.feat_dim, c2), jnp.float32)
        self.b_film = jnp.zeros((1, c2), jnp.float32)

    def _sin_embed(self, v):
        emb = v.astype(jnp.float32)[:, None] * self.sin_scales       # (B, half)
        return jnp.concatenate([jnp.sin(emb), jnp.cos(emb)], axis=-1)

    def random_reupsample(self, x, key):
        """Returns (channels in sorted/padded layout, factor indices, slot table)."""
        B, C, T = x.shape
        NF = len(self.factors)
        nb = self.nb
        rf = jax.random.randint(key, (B,), 0, NF, dtype=jnp.int32)

        # --- pack same-factor batches into contiguous groups padded to nb batches ---
        fids = jnp.arange(NF, dtype=jnp.int32)
        counts = jnp.sum(rf[None, :] == fids[:, None], axis=1).astype(jnp.int32)
        padded = ((counts + nb - 1) // nb) * nb
        gstart_pad = jnp.concatenate(
            [jnp.zeros((1,), jnp.int32), jnp.cumsum(padded)[:-1].astype(jnp.int32)])
        gstart_orig = jnp.concatenate(
            [jnp.zeros((1,), jnp.int32), jnp.cumsum(counts)[:-1].astype(jnp.int32)])
        order = jnp.argsort(rf).astype(jnp.int32)
        sf = rf[order]
        p = jnp.arange(B, dtype=jnp.int32)
        dest = gstart_pad[sf] + (p - gstart_orig[sf])     # padded slot per sorted batch

        # static upper bound on total padded batches (multiple of nb)
        b_pad = ((B + min(NF, B) * (nb - 1)) // nb) * nb
        b_pad = max(b_pad, nb)

        xs = x[order].astype(jnp.bfloat16)
        if self.t_pad != T:
            xs = jnp.pad(xs, ((0, 0), (0, 0), (0, self.t_pad - T)))
        x_sorted = jnp.zeros((b_pad, C, self.t_pad), jnp.bfloat16).at[dest].set(xs)
        x2d = x_sorted.reshape(b_pad * C, self.t_pad)

        # factor owning each padded slot (row tiles never span two groups)
        slots = jnp.arange(b_pad, dtype=jnp.int32)
        slot_factor = (jnp.sum(slots[:, None] >= gstart_pad[None, :], axis=1) - 1
                       ).astype(jnp.int32)
        block_factor = slot_factor.reshape(b_pad // nb, nb)[:, 0]

        out2d = reupsample_pallas(x2d, self.r_all, block_factor,
                                  self.band_halfwidth, self.tm)
        channels_sorted = out2d.reshape(b_pad, C, self.t_pad)

        # original-batch -> padded-slot table (scalar-prefetched by the tail kernel)
        chan_slot = jnp.zeros((B,), jnp.int32).at[order].set(dest)
        return channels_sorted, rf, chan_slot

    def forward(self, x, key):
        B, C, T = x.shape
        assert C == self.in_channels and T == self.length
        x = x.astype(jnp.float32)
        k_fac, k_sig, k_noise = jax.random.split(key, 3)

        # 1) random re-upsampled conditioning channels + factor-index features
        channels_sorted, rand_factors, chan_slot = self.random_reupsample(x, k_fac)
        features = (self._sin_embed(rand_factors.astype(jnp.float32))
                    if self.use_conditioning else None)

        # 2) v-diffusion noising coefficients (per-batch scalars)
        sigmas = jax.random.uniform(k_sig, (B,), jnp.float32)
        noise = jax.random.normal(k_noise, x.shape, jnp.float32)
        angle = sigmas * (math.pi / 2.0)
        ab = jnp.stack([jnp.cos(angle), jnp.sin(angle)], axis=1).reshape(B, 2, 1)

        # 3) conditioning -> FiLM scale/shift (tiny (B,F)x(F,2C) dot, plain JAX)
        t_emb = self._sin_embed(sigmas)
        cond = t_emb + features if features is not None else t_emb
        film = (cond @ self.w_film + self.b_film).reshape(B, 2 * C, 1)

        # 4) fused noising + denoiser + v-target + per-batch squared-error sums
        if self.t_pad != T:
            pad = ((0, 0), (0, 0), (0, self.t_pad - T))
            x_t = jnp.pad(x, pad)
            noise_t = jnp.pad(noise, pad)
        else:
            x_t, noise_t = x, noise
        sse = tail_pallas(chan_slot, x_t, noise_t, ab, film, channels_sorted,
                          self.w3, self.bc, T)                      # (B, C, 1)
        loss = jnp.sum(sse) / float(B * C * T)
        return loss


if __name__ == "__main__":
    key = jax.random.PRNGKey(0)
    k_param, k_x, k_fwd = jax.random.split(key, 3)

    # Main path: length already a multiple of 128, two factors, with conditioning.
    B, C, T = 2, 4, 128
    model = DiffusionUpsampler1dPallas(
        in_channels=C, factor=[2, 4], length=T, factor_features=32, key=k_param
    )
    x = jax.random.normal(k_x, (B, C, T), jnp.float32)
    loss = model.forward(x, k_fwd)
    jax.block_until_ready(loss)
    assert bool(jnp.isfinite(loss))

    # Irregular-length path: exercises lane padding + single-factor grouping,
    # no conditioning features.
    model2 = DiffusionUpsampler1dPallas(
        in_channels=4, factor=[2], length=48, factor_features=None, key=k_param
    )
    x2 = jax.random.normal(k_x, (2, 4, 48), jnp.float32)
    loss2 = model2.forward(x2, k_fwd)
    jax.block_until_ready(loss2)
    assert bool(jnp.isfinite(loss2))

    print("KERNEL_OK")
</pallas_src>

<mosaic_0001>
module attributes {stable_mosaic.version = 11 : i64} {
  func.func @_reup_kernel(%arg0: i32, %arg1: i32, %arg2: i32, %arg3: memref<2xi32, #tpu.memory_space<smem>>, %arg4: memref<128x128xbf16, #tpu.memory_space<vmem>>, %arg5: memref<1x128x128xbf16, #tpu.memory_space<vmem>>, %arg6: memref<128x128xf32, #tpu.memory_space<vmem>>, %arg7: memref<128x128xf32, #tpu.memory_space<vmem>>) attributes {dimension_semantics = [#tpu.dimension_semantics<parallel>, #tpu.dimension_semantics<parallel>, #tpu.dimension_semantics<arbitrary>], iteration_bounds = array<i64: 2, 1, 1>, scalar_prefetch = 1 : i64, scratch_operands = 1 : i64, tpu.core_type = #tpu.core_type<tc>, window_params = [{transform_indices = @transform_0, window_bounds = array<i64: 128, 128>}, {transform_indices = @transform_1, window_bounds = array<i64: 1, 128, 128>}, {transform_indices = @transform_2, window_bounds = array<i64: 128, 128>}]} {
    %c0_i32 = arith.constant 0 : i32
    %0 = arith.cmpi eq, %arg2, %c0_i32 : i32
    %1 = arith.extui %0 : i1 to i32
    %c0_i32_0 = arith.constant 0 : i32
    %2 = arith.cmpi ne, %1, %c0_i32_0 : i32
    scf.if %2 {
      %cst_11 = arith.constant 0.000000e+00 : f32
      %13 = vector.broadcast %cst_11 : f32 to vector<128x128xf32>
      %c0_12 = arith.constant 0 : index
      %c0_13 = arith.constant 0 : index
      %14 = vector.load %arg7[%c0_12, %c0_13] : memref<128x128xf32, #tpu.memory_space<vmem>>, vector<128x128xf32>
      tpu.vector_store %arg7[%c0_12, %c0_13], %13 {strides = array<i32>} : memref<128x128xf32, #tpu.memory_space<vmem>>, vector<128x128xf32>,
    } else {
    }
    %c0 = arith.constant 0 : index
    %c0_1 = arith.constant 0 : index
    %3 = vector.load %arg7[%c0, %c0_1] : memref<128x128xf32, #tpu.memory_space<vmem>>, vector<128x128xf32>
    %c0_2 = arith.constant 0 : index
    %c0_3 = arith.constant 0 : index
    %4 = vector.load %arg4[%c0_2, %c0_3] : memref<128x128xbf16, #tpu.memory_space<vmem>>, vector<128x128xbf16>
    %c0_4 = arith.constant 0 : index
    %c0_5 = arith.constant 0 : index
    %c0_6 = arith.constant 0 : index
    %5 = vector.load %arg5[%c0_4, %c0_5, %c0_6] : memref<1x128x128xbf16, #tpu.memory_space<vmem>>, vector<1x128x128xbf16>
    %6 = vector.shape_cast %5 : vector<1x128x128xbf16> to vector<128x128xbf16>
    %cst = arith.constant dense<0.000000e+00> : vector<128x128xf32>
    %7 = tpu.matmul %4, %6, %cst {dimension_numbers = #tpu.dot_dimension_numbers<[1], [0], [0], [1], [0, 0, 1, 1], [], []>} : vector<128x128xbf16>, vector<128x128xbf16>, vector<128x128xf32> -> vector<128x128xf32>
    %8 = arith.addf %3, %7 : vector<128x128xf32>
    %c0_7 = arith.constant 0 : index
    %c0_8 = arith.constant 0 : index
    %9 = vector.load %arg7[%c0_7, %c0_8] : memref<128x128xf32, #tpu.memory_space<vmem>>, vector<128x128xf32>
    tpu.vector_store %arg7[%c0_7, %c0_8], %8 {strides = array<i32>} : memref<128x128xf32, #tpu.memory_space<vmem>>, vector<128x128xf32>,
    %c0_i32_9 = arith.constant 0 : i32
    %10 = arith.cmpi eq, %arg2, %c0_i32_9 : i32
    %11 = arith.extui %10 : i1 to i32
    %c0_i32_10 = arith.constant 0 : i32
    %12 = arith.cmpi ne, %11, %c0_i32_10 : i32
    scf.if %12 {
      %c0_11 = arith.constant 0 : index
      %c0_12 = arith.constant 0 : index
      %13 = vector.load %arg7[%c0_11, %c0_12] : memref<128x128xf32, #tpu.memory_space<vmem>>, vector<128x128xf32>
      %c0_13 = arith.constant 0 : index
      %c0_14 = arith.constant 0 : index
      %14 = vector.load %arg6[%c0_13, %c0_14] : memref<128x128xf32, #tpu.memory_space<vmem>>, vector<128x128xf32>
      tpu.vector_store %arg6[%c0_13, %c0_14], %13 {strides = array<i32>} : memref<128x128xf32, #tpu.memory_space<vmem>>, vector<128x128xf32>,
    } else {
    }
    return
  }
  func.func @transform_0(%arg0: i32, %arg1: i32, %arg2: i32, %arg3: memref<2xi32, #tpu.memory_space<smem>>) -> (i32, i32) {
    %c0_i32 = arith.constant 0 : i32
    return %arg0, %arg2 : i32, i32
  }
  func.func @transform_1(%arg0: i32, %arg1: i32, %arg2: i32, %arg3: memref<2xi32, #tpu.memory_space<smem>>) -> (i32, i32, i32) {
    %0 = arith.index_cast %arg0 : i32 to index
    %1 = memref.load %arg3[%0] : memref<2xi32, #tpu.memory_space<smem>>
    %c0_i32 = arith.constant 0 : i32
    return %1, %arg2, %arg1 : i32, i32, i32
  }
  func.func @transform_2(%arg0: i32, %arg1: i32, %arg2: i32, %arg3: memref<2xi32, #tpu.memory_space<smem>>) -> (i32, i32) {
    %c0_i32 = arith.constant 0 : i32
    return %arg0, %arg1 : i32, i32
  }
}

</mosaic_0001>

<llo_original>
// kernel: tpu_custom_call.1
$region0: #{tpu_custom_call.1}
  #allocation0 [shape = 'u32[]', space=smem, size = 0x4, offset = 0x4, fixed_abs, tag = 'smem constant byte address 0x4 - core index']
  #allocation1 [shape = 'u32[72,128]{1,0:T(1,128)}', space=vmem, size = 0x9000, scoped, tag = 'internal scratch']
  #allocation2 [shape = 'f32[128,128]{1,0:T(8,128)}', space=vmem, size = 0x10000, scoped, tag = 'scratch operand']
  #allocation3 [shape = 's32[1]{0}', space=sflag, size = 0x4, scoped, tag = 'scoped memory for tpu_custom_call.1']
  #allocation4 [shape = 'u8[512]{0}', space=smem, size = 0x200, scoped, tag = 'prefetched SMEM operand 0']
  %s0 = inlined_call_operand.hbm [shape: s32[2], index: 0, kind: input, shape index: {}]
  %s1 = inlined_call_operand.hbm [shape: bf16[256,128], index: 1, kind: input, shape index: {}]
  %s2 = inlined_call_operand.hbm [shape: bf16[2,128,128], index: 2, kind: input, shape index: {}]
  %s3 = inlined_call_operand.hbm [shape: f32[256,128], index: 3, kind: output, shape index: {}]
  %s4 = sld [smem:[#allocation0]]
  $region57: #{tpu_custom_call.1} parent=0
    _
  %s6 = ssub.s32 1, %s4
  %s7 = scalar_select 0, %s6, %s4
  %s9 = sshll.u32 %s0, 4
  %s10 = int_to_ptr.hbm [resolvable:$true] %s9
  %12 = dma.hbm_to_smem %s10, 16, [#allocation4], [#allocation3]
  %14 = dma.done [#allocation3], 16
  %15 = sfence
  $region1: #{tpu_custom_call.1} parent=0
    #allocation5 [shape = 'u8[65536]{0}', space=vmem, size = 0x10000, scoped, tag = 'input window, operand 1']
    #allocation6 [shape = 's32[2]{0}', space=sflag, size = 0x8, scoped, tag = 'scoped memory for tpu_custom_call.1']
    #allocation7 [shape = 's32[2]{0}', space=sflag, size = 0x8, scoped, tag = 'scoped memory for tpu_custom_call.1']
    #allocation8 [shape = 'u8[65536]{0}', space=vmem, size = 0x10000, scoped, tag = 'input window, operand 2']
    #allocation9 [shape = 's32[2]{0}', space=sflag, size = 0x8, scoped, tag = 'scoped memory for tpu_custom_call.1']
    #allocation10 [shape = 'u8[131072]{0}', space=vmem, size = 0x20000, scoped, tag = 'output window, operand 0']
    %16 = vsyncpa [#allocation6], 0
    %s17 = scalar_lea.sflag [#allocation6], 1
    %18 = vsyncpa %s17, 0
    %19 = vsyncpa [#allocation9], 0
    %s20 = scalar_lea.sflag [#allocation9], 1
    %21 = vsyncpa %s20, 0
    %22 = vsyncpa [#allocation7], 0
    %s23 = scalar_lea.sflag [#allocation7], 1
    %24 = vsyncpa %s23, 0
    loop: start=0, step=1, limit=4
    $region2: #{tpu_custom_call.1} parent=1 // loop_pre_header
      _
    $region3: #{tpu_custom_call.1} parent=1 // loop_header
      %s26 = sphi 0, %s30
      %p27 = scmp.ge.s32.totalorder %s26, 4
      %s33 = sphi 0, %s52
      %s34 = sphi 0, %s48
      %s35 = sphi 0, %s44
      %s36 = sphi 0, %s33
      %s37 = sphi 0, %s34
      %s38 = sphi 0, %s35
      %s39 = sphi 0, %s36
      %s40 = sphi 0, %s37
      %s41 = sphi 0, %s38
      %s57 = sphi 0, %s59
      %s60 = sphi 0, %s57
      %s61 = sphi 0, %s60
      %s77 = sphi 0, %s61
      %s89 = sphi 0, %s91
      %s92 = sphi 0, %s89
      %s93 = sphi 0, %s92
      %s109 = sphi 0, %s93
      %s117 = sphi 0, %s119
      %s120 = sphi 0, %s117
      %s121 = sphi 0, %s120
      %s137 = sphi 0, %s121
    $region4: #{tpu_custom_call.1} parent=1 // loop_header_branch
      %29 = sbr.rel (%p27) target = $region8
    $region5: #{tpu_custom_call.1} parent=1 // loop_body
      %s31 = ssub.s32 %s26, 1
      %s32 = ssub.s32 %s26, 2
      %s42 = sadd.s32 1, %s35
      %p43 = scmp.ge.s32.totalorder %s42, 1
      %s44 = scalar_select %p43, 0, %s42
      %s45 = sadd.s32 1, %s34
      %s46 = scalar_select %p43, %s45, %s34
      %p47 = scmp.ge.s32.totalorder %s46, 1
      %s48 = scalar_select %p47, 0, %s46
      %s49 = sadd.s32 1, %s33
      %s50 = scalar_select %p47, %s49, %s33
      %p51 = scmp.ge.s32.totalorder %s50, 2
      %s52 = scalar_select %p51, 0, %s50
      %s53 = ssub.s32 %s33, %s52
      %s54 = ssub.s32 %s35, %s44
      %s55 = sor.u32 %s53, %s54
      %p56 = scmp.eq.s32.totalorder %s55, 0
      %s58 = sadd.s32 %s57, 1
      %s59 = scalar_select %p56, %s57, %s58
      %p62 = pneg %p56
      %p63 = scmp.eq.s32.totalorder %s26, 1
      %p64 = por %p62, %p63
      %p65 = scmp.ne.s32.totalorder %s57, %s60
      %p66 = scmp.eq.s32.totalorder %s26, 0
      %p67 = por %p65, %p66
      %p68 = scmp.ne.s32.totalorder %s57, %s60
      %p69 = scmp.eq.s32.totalorder %s31, 1
      %p70 = por %p68, %p69
      %p71 = scmp.ne.s32.totalorder %s60, %s61
      %p72 = scmp.eq.s32.totalorder %s31, 0
      %p73 = por %p71, %p72
      %p74 = scmp.ne.s32.totalorder %s60, %s61
      %p75 = scmp.eq.s32.totalorder %s32, 1
      %p76 = por %p74, %p75
      %p78 = scmp.ne.s32.totalorder %s61, %s77
      %p79 = scmp.eq.s32.totalorder %s32, 0
      %p80 = por %p78, %p79
      %s81 = sld [smem:[#allocation4 + %s33]]
      %s82 = sld [smem:[#allocation4 + %s52]]
      %s83 = ssub.s32 %s81, %s82
      %s84 = ssub.s32 %s35, %s44
      %s85 = sor.u32 %s83, %s84
      %s86 = ssub.s32 %s34, %s48
      %s87 = sor.u32 %s85, %s86
      %p88 = scmp.eq.s32.totalorder %s87, 0
      %s90 = sadd.s32 %s89, 1
      %s91 = scalar_select %p88, %s89, %s90
      %p94 = pneg %p88
      %p95 = scmp.eq.s32.totalorder %s26, 1
      %p96 = por %p94, %p95
      %p97 = scmp.ne.s32.totalorder %s89, %s92
      %p98 = scmp.eq.s32.totalorder %s26, 0
      %p99 = por %p97, %p98
      %p100 = scmp.ne.s32.totalorder %s89, %s92
      %p101 = scmp.eq.s32.totalorder %s31, 1
      %p102 = por %p100, %p101
      %p103 = scmp.ne.s32.totalorder %s92, %s93
      %p104 = scmp.eq.s32.totalorder %s31, 0
      %p105 = por %p103, %p104
      %p106 = scmp.ne.s32.totalorder %s92, %s93
      %p107 = scmp.eq.s32.totalorder %s32, 1
      %p108 = por %p106, %p107
      %p110 = scmp.ne.s32.totalorder %s93, %s109
      %p111 = scmp.eq.s32.totalorder %s32, 0
      %p112 = por %p110, %p111
      %s113 = ssub.s32 %s33, %s52
      %s114 = ssub.s32 %s34, %s48
      %s115 = sor.u32 %s113, %s114
      %p116 = scmp.eq.s32.totalorder %s115, 0
      %s118 = sadd.s32 %s117, 1
      %s119 = scalar_select %p116, %s117, %s118
      %p122 = pneg %p116
      %p123 = scmp.eq.s32.totalorder %s26, 1
      %p124 = por %p122, %p123
      %p125 = scmp.ne.s32.totalorder %s117, %s120
      %p126 = scmp.eq.s32.totalorder %s26, 0
      %p127 = por %p125, %p126
      %p128 = scmp.ne.s32.totalorder %s117, %s120
      %p129 = scmp.eq.s32.totalorder %s31, 1
      %p130 = por %p128, %p129
      %p131 = scmp.ne.s32.totalorder %s120, %s121
      %p132 = scmp.eq.s32.totalorder %s31, 0
      %p133 = por %p131, %p132
      %p134 = scmp.ne.s32.totalorder %s120, %s121
      %p135 = scmp.eq.s32.totalorder %s32, 1
      %p136 = por %p134, %p135
      %p138 = scmp.ne.s32.totalorder %s121, %s137
      %p139 = scmp.eq.s32.totalorder %s32, 0
      %p140 = por %p138, %p139
      %p141 = scmp.le.s32.totalorder 1, %s26
      %p142 = scmp.lt.s32.totalorder %s26, 3
      %p143 = pnand %p141, %p142
      %p144 = pneg %p143
      // Predicated region
      $region9: #{tpu_custom_call.1} parent=5 // pred_check
        _
      $region10: #{tpu_custom_call.1} parent=5 // pred_check_branch
        %146 = sbr.rel (%p143) target = $region12
      $region11: #{tpu_custom_call.1} parent=5 // pred_region
        %s147 = ssub.s32 %s26, 1
      $region12: #{tpu_custom_call.1} parent=5 // pred_fallthru
        _
      %p148 = scmp.lt.s32.totalorder %s26, 2
      // Predicated region
      $region13: #{tpu_custom_call.1} parent=5 // pred_check
        %p149 = pneg %p148
      $region14: #{tpu_custom_call.1} parent=5 // pred_check_branch
        %151 = sbr.rel (%p149) target = $region16
      $region15: #{tpu_custom_call.1} parent=5 // pred_region
        // Predicated region
        $region17: #{tpu_custom_call.1} parent=15 // pred_check
          %p152 = pneg %p67
        $region18: #{tpu_custom_call.1} parent=15 // pred_check_branch
          %154 = sbr.rel (%p152) target = $region20
        $region19: #{tpu_custom_call.1} parent=15 // pred_region
          %s155 = sand.u32 %s57, 1
          %s156 = scalar_lea.sflag [#allocation6], %s155
          %s157 = sand.u32 %s57, 1
          %s158 = smul.addr %s157, 64
          %s159 = scalar_lea.vmem [#allocation5], %s158
          %s160 = smul.u32 16, %s33
          %162 = vsyncadd %s156, 0
          %s163 = sadd.s32 %s35, %s160
          %s164 = smul.addr %s163, 4
          %s165 = scalar_lea.hbm %s1, %s164
          %s166 = sshll.u32 %s165, 4
          %s167 = int_to_ptr.hbm [resolvable:$true] %s166
          %s168 = sshll.u32 %s159, 4
          %s169 = int_to_ptr.vmem [resolvable:$true] %s168
          %174 = dma.hbm_to_vmem [thread:$0]  %s167, 1024, %s169, %s156, 64, 64, 4
        $region20: #{tpu_custom_call.1} parent=15 // pred_fallthru
          _
        // Predicated region
        $region21: #{tpu_custom_call.1} parent=15 // pred_check
          %p175 = pneg %p99
        $region22: #{tpu_custom_call.1} parent=15 // pred_check_branch
          %177 = sbr.rel (%p175) target = $region24
        $region23: #{tpu_custom_call.1} parent=15 // pred_region
          %s178 = sand.u32 %s89, 1
          %s179 = scalar_lea.sflag [#allocation9], %s178
          %s180 = sand.u32 %s89, 1
          %s181 = smul.addr %s180, 64
          %s182 = scalar_lea.vmem [#allocation8], %s181
          %s183 = sld [smem:[#allocation4 + %s33]]
          %s184 = smul.u32 16, %s35
          %186 = vsyncadd %s179, 0
          %s187 = sadd.s32 %s34, %s184
          %s188 = smul.addr %s183, 16
          %s189 = sadd.s32 %s187, %s188
          %s190 = smul.addr %s189, 4
          %s191 = scalar_lea.hbm %s2, %s190
          %s192 = sshll.u32 %s191, 4
          %s193 = int_to_ptr.hbm [resolvable:$true] %s192
          %s194 = sshll.u32 %s182, 4
          %s195 = int_to_ptr.vmem [resolvable:$true] %s194
          %200 = dma.hbm_to_vmem [thread:$0]  %s193, 1024, %s195, %s179, 64, 64, 4
        $region24: #{tpu_custom_call.1} parent=15 // pred_fallthru
          _
      $region16: #{tpu_custom_call.1} parent=5 // pred_fallthru
        _
      %p201 = scmp.le.s32.totalorder 1, %s26
      %p202 = scmp.lt.s32.totalorder %s26, 3
      %p203 = pnand %p201, %p202
      %p204 = pneg %p203
      // Predicated region
      $region25: #{tpu_custom_call.1} parent=5 // pred_check
        _
      $region26: #{tpu_custom_call.1} parent=5 // pred_check_branch
        %206 = sbr.rel (%p203) target = $region28
      $region27: #{tpu_custom_call.1} parent=5 // pred_region
        %s207 = ssub.s32 %s26, 1
        %s208 = sand.u32 %s60, 1
        %s209 = scalar_lea.sflag [#allocation6], %s208
        %s210 = sand.u32 %s60, 1
        %s211 = smul.addr %s210, 64
        %s212 = scalar_lea.vmem [#allocation5], %s211
        // Predicated region
        $region29: #{tpu_custom_call.1} parent=27 // pred_check
          %p213 = pneg %p73
        $region30: #{tpu_custom_call.1} parent=27 // pred_check_branch
          %215 = sbr.rel (%p213) target = $region32
        $region31: #{tpu_custom_call.1} parent=27 // pred_region
          %217 = dma.done %s209, 1024
        $region32: #{tpu_custom_call.1} parent=27 // pred_fallthru
          _
        %s218 = sand.u32 %s92, 1
        %s219 = scalar_lea.sflag [#allocation9], %s218
        %s220 = sand.u32 %s92, 1
        %s221 = smul.addr %s220, 64
        %s222 = scalar_lea.vmem [#allocation8], %s221
        // Predicated region
        $region33: #{tpu_custom_call.1} parent=27 // pred_check
          %p223 = pneg %p105
        $region34: #{tpu_custom_call.1} parent=27 // pred_check_branch
          %225 = sbr.rel (%p223) target = $region36
        $region35: #{tpu_custom_call.1} parent=27 // pred_region
          %227 = dma.done %s219, 1024
        $region36: #{tpu_custom_call.1} parent=27 // pred_fallthru
          _
        %s228 = sand.u32 %s60, 1
        %s229 = scalar_lea.sflag [#allocation6], %s228
        %s230 = sand.u32 %s60, 1
        %s231 = smul.addr %s230, 64
        %s232 = scalar_lea.vmem [#allocation5], %s231
        %p233 = pneg %p73
        %p234 = pneg %p70
        %s235 = sand.u32 %s92, 1
        %s236 = scalar_lea.sflag [#allocation9], %s235
        %s237 = sand.u32 %s92, 1
        %s238 = smul.addr %s237, 64
        %s239 = scalar_lea.vmem [#allocation8], %s238
        %p240 = pneg %p105
        %p241 = pneg %p102
        %p242 = pneg %p133
        %p243 = pneg %p130
        %s244 = sand.u32 %s120, 1
        %s245 = scalar_lea.sflag [#allocation7], %s244
        %s246 = sand.u32 %s120, 1
        %s247 = smul.addr %s246, 128
        %s248 = scalar_lea.vmem [#allocation10], %s247
        %s249 = smul.u32 16, %s36
        %s250 = sld [smem:[#allocation4 + %s36]]
        %s251 = smul.u32 16, %s38
        %s252 = smul.u32 16, %s36
        %p253 = scmp.eq.s32.totalorder %s38, 0
        // Predicated region
        $region37: #{tpu_custom_call.1} parent=27 // pred_check
          %p254 = pneg %p253
        $region38: #{tpu_custom_call.1} parent=27 // pred_check_branch
          %256 = sbr.rel (%p254) target = $region40
        $region39: #{tpu_custom_call.1} parent=27 // pred_region
          %257 = vst [vmem:[#allocation2] sm:$0xff] 0.0
          %258 = vst [vmem:[#allocation2 + $0x8] sm:$0xff] 0.0
          %259 = vst [vmem:[#allocation2 + $0x10] sm:$0xff] 0.0
          %260 = vst [vmem:[#allocation2 + $0x18] sm:$0xff] 0.0
          %261 = vst [vmem:[#allocation2 + $0x20] sm:$0xff] 0.0
          %262 = vst [vmem:[#allocation2 + $0x28] sm:$0xff] 0.0
          %263 = vst [vmem:[#allocation2 + $0x30] sm:$0xff] 0.0
          %264 = vst [vmem:[#allocation2 + $0x38] sm:$0xff] 0.0
          %265 = vst [vmem:[#allocation2 + $0x40] sm:$0xff] 0.0
          %266 = vst [vmem:[#allocation2 + $0x48] sm:$0xff] 0.0
          %267 = vst [vmem:[#allocation2 + $0x50] sm:$0xff] 0.0
          %268 = vst [vmem:[#allocation2 + $0x58] sm:$0xff] 0.0
          %269 = vst [vmem:[#allocation2 + $0x60] sm:$0xff] 0.0
          %270 = vst [vmem:[#allocation2 + $0x68] sm:$0xff] 0.0
          %271 = vst [vmem:[#allocation2 + $0x70] sm:$0xff] 0.0
          %272 = vst [vmem:[#allocation2 + $0x78] sm:$0xff] 0.0
        $region40: #{tpu_custom_call.1} parent=27 // pred_fallthru
          _
        %v273 = vld [vmem:[#allocation2] sm:$0xff]
        %v274 = vld [vmem:[#allocation2 + $0x8] sm:$0xff]
        %v275 = vld [vmem:[#allocation2 + $0x10] sm:$0xff]
        %v276 = vld [vmem:[#allocation2 + $0x18] sm:$0xff]
        %v277 = vld [vmem:[#allocation2 + $0x20] sm:$0xff]
        %v278 = vld [vmem:[#allocation2 + $0x28] sm:$0xff]
        %v279 = vld [vmem:[#allocation2 + $0x30] sm:$0xff]
        %v280 = vld [vmem:[#allocation2 + $0x38] sm:$0xff]
        %v281 = vld [vmem:[#allocation2 + $0x40] sm:$0xff]
        %v282 = vld [vmem:[#allocation2 + $0x48] sm:$0xff]
        %v283 = vld [vmem:[#allocation2 + $0x50] sm:$0xff]
        %v284 = vld [vmem:[#allocation2 + $0x58] sm:$0xff]
        %v285 = vld [vmem:[#allocation2 + $0x60] sm:$0xff]
        %v286 = vld [vmem:[#allocation2 + $0x68] sm:$0xff]
        %v287 = vld [vmem:[#allocation2 + $0x70] sm:$0xff]
        %v288 = vld [vmem:[#allocation2 + $0x78] sm:$0xff]
        %v289 = vld [vmem:[%s212] sm:$0xf]
        %v290 = vld [vmem:[%s212 + $0x4] sm:$0xf]
        %v291 = vld [vmem:[%s212 + $0x8] sm:$0xf]
        %v292 = vld [vmem:[%s212 + $0xc] sm:$0xf]
        %v293 = vld [vmem:[%s212 + $0x10] sm:$0xf]
        %v294 = vld [vmem:[%s212 + $0x14] sm:$0xf]
        %v295 = vld [vmem:[%s212 + $0x18] sm:$0xf]
        %v296 = vld [vmem:[%s212 + $0x1c] sm:$0xf]
        %v297 = vld [vmem:[%s212 + $0x20] sm:$0xf]
        %v298 = vld [vmem:[%s212 + $0x24] sm:$0xf]
        %v299 = vld [vmem:[%s212 + $0x28] sm:$0xf]
        %v300 = vld [vmem:[%s212 + $0x2c] sm:$0xf]
        %v301 = vld [vmem:[%s212 + $0x30] sm:$0xf]
        %v302 = vld [vmem:[%s212 + $0x34] sm:$0xf]
        %v303 = vld [vmem:[%s212 + $0x38] sm:$0xf]
        %v304 = vld [vmem:[%s212 + $0x3c] sm:$0xf]
        %v305 = vld [vmem:[%s222] sm:$0xf]
        %v306 = vld [vmem:[%s222 + $0x4] sm:$0xf]
        %v307 = vld [vmem:[%s222 + $0x8] sm:$0xf]
        %v308 = vld [vmem:[%s222 + $0xc] sm:$0xf]
        %v309 = vld [vmem:[%s222 + $0x10] sm:$0xf]
        %v310 = vld [vmem:[%s222 + $0x14] sm:$0xf]
        %v311 = vld [vmem:[%s222 + $0x18] sm:$0xf]
        %v312 = vld [vmem:[%s222 + $0x1c] sm:$0xf]
        %v313 = vld [vmem:[%s222 + $0x20] sm:$0xf]
        %v314 = vld [vmem:[%s222 + $0x24] sm:$0xf]
        %v315 = vld [vmem:[%s222 + $0x28] sm:$0xf]
        %v316 = vld [vmem:[%s222 + $0x2c] sm:$0xf]
        %v317 = vld [vmem:[%s222 + $0x30] sm:$0xf]
        %v318 = vld [vmem:[%s222 + $0x34] sm:$0xf]
        %v319 = vld [vmem:[%s222 + $0x38] sm:$0xf]
        %v320 = vld [vmem:[%s222 + $0x3c] sm:$0xf]
        %v337 = vunpack.c.l.b16 %v289
        %v338 = vunpack.c.l.b16 %v290
        %v339 = vunpack.c.l.b16 %v291
        %v340 = vunpack.c.l.b16 %v292
        %v341 = vunpack.c.l.b16 %v293
        %v342 = vunpack.c.l.b16 %v294
        %v343 = vunpack.c.l.b16 %v295
        %v344 = vunpack.c.l.b16 %v296
        %v345 = vunpack.c.l.b16 %v297
        %v346 = vunpack.c.l.b16 %v298
        %v347 = vunpack.c.l.b16 %v299
        %v348 = vunpack.c.l.b16 %v300
        %v349 = vunpack.c.l.b16 %v301
        %v350 = vunpack.c.l.b16 %v302
        %v351 = vunpack.c.l.b16 %v303
        %v352 = vunpack.c.l.b16 %v304
        %v353 = vpack.c.b16 %v338, %v337
        %v354 = vpack.c.b16 %v340, %v339
        %v355 = vpack.c.b16 %v342, %v341
        %v356 = vpack.c.b16 %v344, %v343
        %v357 = vpack.c.b16 %v346, %v345
        %v358 = vpack.c.b16 %v348, %v347
        %v359 = vpack.c.b16 %v350, %v349
        %v360 = vpack.c.b16 %v352, %v351
        %v385 = vunpack.c.l.b16 %v305
        %v386 = vunpack.c.l.b16 %v306
        %v387 = vunpack.c.l.b16 %v307
        %v388 = vunpack.c.l.b16 %v308
        %v389 = vunpack.c.l.b16 %v309
        %v390 = vunpack.c.l.b16 %v310
        %v391 = vunpack.c.l.b16 %v311
        %v392 = vunpack.c.l.b16 %v312
        %v393 = vunpack.c.l.b16 %v313
        %v394 = vunpack.c.l.b16 %v314
        %v395 = vunpack.c.l.b16 %v315
        %v396 = vunpack.c.l.b16 %v316
        %v397 = vunpack.c.l.b16 %v317
        %v398 = vunpack.c.l.b16 %v318
        %v399 = vunpack.c.l.b16 %v319
        %v400 = vunpack.c.l.b16 %v320
        %v401 = vpack.c.b16 %v386, %v385
        %v402 = vpack.c.b16 %v388, %v387
        %v403 = vpack.c.b16 %v390, %v389
        %v404 = vpack.c.b16 %v392, %v391
        %v405 = vpack.c.b16 %v394, %v393
        %v406 = vpack.c.b16 %v396, %v395
        %v407 = vpack.c.b16 %v398, %v397
        %v408 = vpack.c.b16 %v400, %v399
        %417 = vmatpush.bf16.msra.mxu0 %v408
        %418 = vmatpush.bf16.msra.mxu0 %v407
        %419 = vmatpush.bf16.msra.mxu0 %v406
        %420 = vmatpush.bf16.msra.mxu0 %v405
        %421 = vmatpush.bf16.msra.mxu0 %v404
        %422 = vmatpush.bf16.msra.mxu0 %v403
        %423 = vmatpush.bf16.msra.mxu0 %v402
        %424 = vmatpush.bf16.msra.mxu0 %v401
        %425 = vmatmul.bf16.gmra.mxu0 %v353
        %v426 = vpop.f32.mrf.mxu0
        %v427 = vadd.f32 0.0, %v426
        %v428 = vpop.f32.mrf.mxu0
        %v429 = vadd.f32 0.0, %v428
        %430 = vmatmul.bf16.gmra.mxu0 %v354
        %v431 = vpop.f32.mrf.mxu0
        %v432 = vadd.f32 0.0, %v431
        %v433 = vpop.f32.mrf.mxu0
        %v434 = vadd.f32 0.0, %v433
        %435 = vmatmul.bf16.gmra.mxu0 %v355
        %v436 = vpop.f32.mrf.mxu0
        %v437 = vadd.f32 0.0, %v436
        %v438 = vpop.f32.mrf.mxu0
        %v439 = vadd.f32 0.0, %v438
        %440 = vmatmul.bf16.gmra.mxu0 %v356
        %v441 = vpop.f32.mrf.mxu0
        %v442 = vadd.f32 0.0, %v441
        %v443 = vpop.f32.mrf.mxu0
        %v444 = vadd.f32 0.0, %v443
        %445 = vmatmul.bf16.gmra.mxu0 %v357
        %v446 = vpop.f32.mrf.mxu0
        %v447 = vadd.f32 0.0, %v446
        %v448 = vpop.f32.mrf.mxu0
        %v449 = vadd.f32 0.0, %v448
        %450 = vmatmul.bf16.gmra.mxu0 %v358
        %v451 = vpop.f32.mrf.mxu0
        %v452 = vadd.f32 0.0, %v451
        %v453 = vpop.f32.mrf.mxu0
        %v454 = vadd.f32 0.0, %v453
        %455 = vmatmul.bf16.gmra.mxu0 %v359
        %v456 = vpop.f32.mrf.mxu0
        %v457 = vadd.f32 0.0, %v456
        %v458 = vpop.f32.mrf.mxu0
        %v459 = vadd.f32 0.0, %v458
        %460 = vmatmul.bf16.gmra.mxu0 %v360
        %v461 = vpop.f32.mrf.mxu0
        %v462 = vadd.f32 0.0, %v461
        %v463 = vpop.f32.mrf.mxu0
        %v464 = vadd.f32 0.0, %v463
        %465 = vdwg.mxu0
        %v466 = vadd.f32 %v273, %v427
        %v467 = vadd.f32 %v274, %v429
        %v468 = vadd.f32 %v275, %v432
        %v469 = vadd.f32 %v276, %v434
        %v470 = vadd.f32 %v277, %v437
        %v471 = vadd.f32 %v278, %v439
        %v472 = vadd.f32 %v279, %v442
        %v473 = vadd.f32 %v280, %v444
        %v474 = vadd.f32 %v281, %v447
        %v475 = vadd.f32 %v282, %v449
        %v476 = vadd.f32 %v283, %v452
        %v477 = vadd.f32 %v284, %v454
        %v478 = vadd.f32 %v285, %v457
        %v479 = vadd.f32 %v286, %v459
        %v480 = vadd.f32 %v287, %v462
        %v481 = vadd.f32 %v288, %v464
        %482 = vst [vmem:[#allocation2] sm:$0xff] %v466
        %483 = vst [vmem:[#allocation2 + $0x8] sm:$0xff] %v467
        %484 = vst [vmem:[#allocation2 + $0x10] sm:$0xff] %v468
        %485 = vst [vmem:[#allocation2 + $0x18] sm:$0xff] %v469
        %486 = vst [vmem:[#allocation2 + $0x20] sm:$0xff] %v470
        %487 = vst [vmem:[#allocation2 + $0x28] sm:$0xff] %v471
        %488 = vst [vmem:[#allocation2 + $0x30] sm:$0xff] %v472
        %489 = vst [vmem:[#allocation2 + $0x38] sm:$0xff] %v473
        %490 = vst [vmem:[#allocation2 + $0x40] sm:$0xff] %v474
        %491 = vst [vmem:[#allocation2 + $0x48] sm:$0xff] %v475
        %492 = vst [vmem:[#allocation2 + $0x50] sm:$0xff] %v476
        %493 = vst [vmem:[#allocation2 + $0x58] sm:$0xff] %v477
        %494 = vst [vmem:[#allocation2 + $0x60] sm:$0xff] %v478
        %495 = vst [vmem:[#allocation2 + $0x68] sm:$0xff] %v479
        %496 = vst [vmem:[#allocation2 + $0x70] sm:$0xff] %v480
        %497 = vst [vmem:[#allocation2 + $0x78] sm:$0xff] %v481
        // Predicated region
        $region41: #{tpu_custom_call.1} parent=27 // pred_check
          %p498 = pneg %p253
        $region42: #{tpu_custom_call.1} parent=27 // pred_check_branch
          %500 = sbr.rel (%p498) target = $region44
        $region43: #{tpu_custom_call.1} parent=27 // pred_region
          %v501 = vld [vmem:[#allocation2] sm:$0xff]
          %v502 = vld [vmem:[#allocation2 + $0x8] sm:$0xff]
          %v503 = vld [vmem:[#allocation2 + $0x10] sm:$0xff]
          %v504 = vld [vmem:[#allocation2 + $0x18] sm:$0xff]
          %v505 = vld [vmem:[#allocation2 + $0x20] sm:$0xff]
          %v506 = vld [vmem:[#allocation2 + $0x28] sm:$0xff]
          %v507 = vld [vmem:[#allocation2 + $0x30] sm:$0xff]
          %v508 = vld [vmem:[#allocation2 + $0x38] sm:$0xff]
          %v509 = vld [vmem:[#allocation2 + $0x40] sm:$0xff]
          %v510 = vld [vmem:[#allocation2 + $0x48] sm:$0xff]
          %v511 = vld [vmem:[#allocation2 + $0x50] sm:$0xff]
          %v512 = vld [vmem:[#allocation2 + $0x58] sm:$0xff]
          %v513 = vld [vmem:[#allocation2 + $0x60] sm:$0xff]
          %v514 = vld [vmem:[#allocation2 + $0x68] sm:$0xff]
          %v515 = vld [vmem:[#allocation2 + $0x70] sm:$0xff]
          %v516 = vld [vmem:[#allocation2 + $0x78] sm:$0xff]
          %517 = vst [vmem:[%s248] sm:$0xff] %v501
          %518 = vst [vmem:[%s248 + $0x8] sm:$0xff] %v502
          %519 = vst [vmem:[%s248 + $0x10] sm:$0xff] %v503
          %520 = vst [vmem:[%s248 + $0x18] sm:$0xff] %v504
          %521 = vst [vmem:[%s248 + $0x20] sm:$0xff] %v505
          %522 = vst [vmem:[%s248 + $0x28] sm:$0xff] %v506
          %523 = vst [vmem:[%s248 + $0x30] sm:$0xff] %v507
          %524 = vst [vmem:[%s248 + $0x38] sm:$0xff] %v508
          %525 = vst [vmem:[%s248 + $0x40] sm:$0xff] %v509
          %526 = vst [vmem:[%s248 + $0x48] sm:$0xff] %v510
          %527 = vst [vmem:[%s248 + $0x50] sm:$0xff] %v511
          %528 = vst [vmem:[%s248 + $0x58] sm:$0xff] %v512
          %529 = vst [vmem:[%s248 + $0x60] sm:$0xff] %v513
          %530 = vst [vmem:[%s248 + $0x68] sm:$0xff] %v514
          %531 = vst [vmem:[%s248 + $0x70] sm:$0xff] %v515
          %532 = vst [vmem:[%s248 + $0x78] sm:$0xff] %v516
        $region44: #{tpu_custom_call.1} parent=27 // pred_fallthru
          _
        %s533 = sand.u32 %s120, 1
        %s534 = scalar_lea.sflag [#allocation7], %s533
        %s535 = sand.u32 %s120, 1
        %s536 = smul.addr %s535, 128
        %s537 = scalar_lea.vmem [#allocation10], %s536
        // Predicated region
        $region45: #{tpu_custom_call.1} parent=27 // pred_check
          %p538 = pneg %p130
        $region46: #{tpu_custom_call.1} parent=27 // pred_check_branch
          %540 = sbr.rel (%p538) target = $region48
        $region47: #{tpu_custom_call.1} parent=27 // pred_region
          %s541 = smul.u32 16, %s36
          %543 = vsyncadd %s534, 0
          %s544 = sadd.s32 %s37, %s541
          %s545 = smul.addr %s544, 8
          %s546 = scalar_lea.hbm %s3, %s545
          %s547 = sshll.u32 %s537, 4
          %s548 = int_to_ptr.vmem [resolvable:$true] %s547
          %s549 = sshll.u32 %s546, 4
          %s550 = int_to_ptr.hbm [resolvable:$true] %s549
          %555 = dma.vmem_to_hbm [thread:$0]  %s548, 2048, %s550, %s534, 128, 128, 8
        $region48: #{tpu_custom_call.1} parent=27 // pred_fallthru
          _
      $region28: #{tpu_custom_call.1} parent=5 // pred_fallthru
        _
      %p556 = scmp.le.s32.totalorder 2, %s26
      // Predicated region
      $region49: #{tpu_custom_call.1} parent=5 // pred_check
        %p557 = pneg %p556
      $region50: #{tpu_custom_call.1} parent=5 // pred_check_branch
        %559 = sbr.rel (%p557) target = $region52
      $region51: #{tpu_custom_call.1} parent=5 // pred_region
        %s560 = ssub.s32 %s26, 2
        // Predicated region
        $region53: #{tpu_custom_call.1} parent=51 // pred_check
          %p561 = pneg %p136
        $region54: #{tpu_custom_call.1} parent=51 // pred_check_branch
          %563 = sbr.rel (%p561) target = $region56
        $region55: #{tpu_custom_call.1} parent=51 // pred_region
          %s564 = sand.u32 %s121, 1
          %s565 = scalar_lea.sflag [#allocation7], %s564
          %s566 = sand.u32 %s121, 1
          %s567 = smul.addr %s566, 128
          %s568 = scalar_lea.vmem [#allocation10], %s567
          %570 = dma.done %s565, 2048
        $region56: #{tpu_custom_call.1} parent=51 // pred_fallthru
          _
      $region52: #{tpu_custom_call.1} parent=5 // pred_fallthru
        _
    $region6: #{tpu_custom_call.1} parent=1 // loop_footer
      %s30 = sadd.s32 1, %s26
    $region7: #{tpu_custom_call.1} parent=1 // loop_footer_branch
      %25 = sbr.rel target = $region3
    $region8: #{tpu_custom_call.1} parent=1 // loop_exit
      _
    %571 = vsyncpa [#allocation6], 1
    %s572 = scalar_lea.sflag [#allocation6], 1
    %573 = vsyncpa %s572, 1
    %574 = vsyncpa [#allocation9], 1
    %s575 = scalar_lea.sflag [#allocation9], 1
    %576 = vsyncpa %s575, 1
    %577 = vsyncpa [#allocation7], 1
    %s578 = scalar_lea.sflag [#allocation7], 1
    %579 = vsyncpa %s578, 1

</llo_original>
